<compile_context>
chip_gen: v7x
topology: tpu7x:2x2x1
jax: 0.10.0
libtpu: 0.0.40
codegen_flags: <defaults>
</compile_context>

<pallas_src>
import math

import jax
import jax.numpy as jnp
from jax.experimental import pallas as pl
from jax.experimental.pallas import tpu as pltpu


def _round_up(x: int, m: int) -> int:
    return ((x + m - 1) // m) * m


def _prelu_kernel(a_ref, x_ref, o_ref):
    # a_ref: (Pa, tn) slope slab (f32 or activation dtype).
    #   Pa == 1  -> plain per-lane broadcast over the row tile.
    #   Pa  > 1  -> alpha pattern repeats every Pa rows; view the x block as
    #               (tm//Pa, Pa, tn) and broadcast the slab over the leading axis.
    # x_ref, o_ref: (tm, tn) in the activation dtype.
    x = x_ref[...]
    a = a_ref[...]
    pa = a_ref.shape[0]
    if pa == 1:
        neg = (x * a).astype(o_ref.dtype)
        o_ref[...] = jnp.where(x > 0, x, neg)
    else:
        tm, tn = x_ref.shape
        x3 = x.reshape(tm // pa, pa, tn)          # tile-aligned (Pa % 8 == 0): free
        neg = (x3 * a[None]).astype(o_ref.dtype)
        o_ref[...] = jnp.where(x3 > 0, x3, neg).reshape(tm, tn)


def prelu(x: jax.Array, alpha: jax.Array, *,
          max_block_bytes: int = 8 * 1024 * 1024,
          force_f32_slope: bool = False,
          donate_x: bool = False) -> jax.Array:
    """x: (B, T, C); alpha: (C,) per-channel slope. Returns x's shape/dtype."""
    B, T, C = x.shape
    assert alpha.shape == (C,)
    rows = B * T
    itemsize = jnp.dtype(x.dtype).itemsize
    sub = {4: 8, 2: 16, 1: 32}.get(itemsize, 8)   # packed-sublane tile per dtype

    # Slope compute dtype: native for 16-bit activations (halves vreg pressure,
    # keeps kernel cleanly HBM-bound), f32 otherwise / when parity is requested.
    if (not force_f32_slope) and jnp.dtype(x.dtype) in (
            jnp.dtype(jnp.bfloat16), jnp.dtype(jnp.float16)):
        a_cd = alpha.astype(x.dtype)
    else:
        a_cd = alpha.astype(jnp.float32)

    # ---- layout selection: lane-dense whenever possible --------------------
    if C % 128 == 0:
        # Natural layout is already lane-dense; supports lane tiling for huge C.
        n_rows, lane_c, Pa = rows, C, 1
        x2d = x.reshape(n_rows, lane_c)
        a_arr = a_cd.reshape(1, lane_c)
    else:
        # Flatten to 128-lane rows; channel of element (r, l) is (r*128+l) % C,
        # a pattern with row-period P = lcm(C,128)//128.
        P = math.lcm(C, 128) // 128
        Pa_try = 1 if P == 1 else math.lcm(P, sub)
        n_rows_packed = (rows * C) // 128
        if (rows * C) % 128 == 0 and Pa_try <= 1024 and n_rows_packed >= Pa_try:
            n_rows, lane_c, Pa = n_rows_packed, 128, Pa_try
            x2d = x.reshape(n_rows, lane_c)
            lane_idx = jnp.arange(Pa * 128, dtype=jnp.int32) % C
            a_arr = a_cd[lane_idx].reshape(Pa, lane_c)
        else:
            # Fallback: keep (rows, C). Block dims equal the full array dims
            # (legal); stores may be partially masked but semantics unchanged.
            n_rows, lane_c, Pa = rows, C, 1
            x2d = x.reshape(n_rows, lane_c)
            a_arr = a_cd.reshape(1, lane_c)

    # ---- lane tiling: never let a minimal block exceed the byte budget ------
    if Pa == 1 and lane_c > 128 and sub * lane_c * itemsize > max_block_bytes:
        tn = max(128, (max_block_bytes // (sub * itemsize)) // 128 * 128)
        tn = min(tn, lane_c)
    else:
        tn = lane_c

    # ---- row-tile size: big blocks, alpha-period aligned, >=2 blocks --------
    align = Pa if Pa > 1 else sub
    tm_budget = max(align, (max_block_bytes // max(1, tn * itemsize)) // align * align)
    if n_rows >= 2 * align:
        # Cap so the row axis has >= 2 blocks -> both TensorCores used on v7x.
        tm = min(tm_budget, _round_up(pl.cdiv(n_rows, 2), align))
    elif Pa > 1:
        tm = align                                # 1-2 blocks, last one masked
    else:
        tm = min(tm_budget, n_rows)               # single full-dim block

    grid = (pl.cdiv(n_rows, tm), pl.cdiv(lane_c, tn))

    # ---- VMEM limit from the actual double-buffered footprint ---------------
    a_item = jnp.dtype(a_arr.dtype).itemsize
    footprint = 4 * tm * tn * itemsize + 2 * Pa * tn * a_item   # 2 bufs x (in+out) + alpha
    vmem_limit = int(min(60 * 1024 * 1024,
                         max(16 * 1024 * 1024, footprint + 4 * 1024 * 1024)))

    cost = pl.CostEstimate(
        flops=2 * rows * C,
        transcendentals=0,
        bytes_accessed=2 * rows * C * itemsize + Pa * lane_c * a_item,
    )

    out2d = pl.pallas_call(
        _prelu_kernel,
        out_shape=jax.ShapeDtypeStruct((n_rows, lane_c), x.dtype),
        grid_spec=pltpu.PrefetchScalarGridSpec(
            num_scalar_prefetch=0,
            grid=grid,
            in_specs=[
                pl.BlockSpec((Pa, tn), lambda i, j: (0, j)),    # alpha slab
                pl.BlockSpec((tm, tn), lambda i, j: (i, j)),    # x tile
            ],
            out_specs=pl.BlockSpec((tm, tn), lambda i, j: (i, j)),
        ),
        compiler_params=pltpu.CompilerParams(
            dimension_semantics=("parallel", "parallel"),       # megacore-shardable
            vmem_limit_bytes=vmem_limit,
        ),
        cost_estimate=cost,
        input_output_aliases=({1: 0} if donate_x else {}),
    )(a_arr, x2d)

    return out2d.reshape(B, T, C)


def prelu_ref(x, alpha):
    # Pure-JAX reference matching torch semantics (slope broadcast over C, f32 weight).
    a = alpha.astype(jnp.float32).reshape(1, 1, -1)
    neg = (x.astype(jnp.float32) * a).astype(x.dtype)
    return jnp.where(x > 0, x, neg)


if __name__ == "__main__":
    key = jax.random.PRNGKey(0)
    keys = jax.random.split(key, 6)

    # 1. Module-consistent shape: x (batch, seq, input_size), C=32 packs 4 rows/lane-row.
    B, T, C = 2, 8, 32
    x = jax.random.normal(keys[0], (B, T, C), dtype=jnp.float32)
    alpha = 0.25 + 0.01 * jnp.arange(C, dtype=jnp.float32)
    out = jax.block_until_ready(prelu(x, alpha))
    assert out.shape == x.shape and out.dtype == x.dtype
    assert jnp.allclose(out, prelu_ref(x, alpha), atol=1e-6, rtol=1e-6)

    # 2. Generalized lane-dense repack: C=48 -> period P=3, alpha slab Pa=24.
    x2 = jax.random.normal(keys[1], (4, 32, 48), dtype=jnp.float32)
    a2 = 0.25 + 0.005 * jnp.arange(48, dtype=jnp.float32)
    out2 = jax.block_until_ready(prelu(x2, a2))
    assert jnp.allclose(out2, prelu_ref(x2, a2), atol=1e-6, rtol=1e-6)

    # 3. Fallback path (rows*C not a multiple of 128): masked stores, still correct.
    x3 = jax.random.normal(keys[2], (2, 6, 48), dtype=jnp.float32)
    a3 = 0.25 + 0.005 * jnp.arange(48, dtype=jnp.float32)
    out3 = jax.block_until_ready(prelu(x3, a3))
    assert jnp.allclose(out3, prelu_ref(x3, a3), atol=1e-6, rtol=1e-6)

    # 4. Ragged row edge + multiple row blocks (tiny forced block budget).
    x4 = jax.random.normal(keys[3], (2, 13, 256), dtype=jnp.float32)
    a4 = 0.25 + 0.002 * jnp.arange(256, dtype=jnp.float32)
    out4 = jax.block_until_ready(prelu(x4, a4, max_block_bytes=8 * 256 * 4))
    assert jnp.allclose(out4, prelu_ref(x4, a4), atol=1e-6, rtol=1e-6)

    # 5. Lane-tiled 2-D grid for wide C (tiny forced budget -> tn=512, 2 lane blocks).
    x5 = jax.random.normal(keys[4], (2, 9, 1024), dtype=jnp.float32)
    a5 = 0.25 + 0.001 * jnp.arange(1024, dtype=jnp.float32)
    out5 = jax.block_until_ready(prelu(x5, a5, max_block_bytes=8 * 512 * 4))
    assert jnp.allclose(out5, prelu_ref(x5, a5), atol=1e-6, rtol=1e-6)

    # 6. bf16 with native-dtype slope (differs from the f32-weight ref by <=1 bf16 ulp).
    x6 = jax.random.normal(keys[5], (2, 8, 32), dtype=jnp.bfloat16)
    a6 = 0.25 + 0.01 * jnp.arange(32, dtype=jnp.float32)
    out6 = jax.block_until_ready(prelu(x6, a6))
    assert out6.dtype == jnp.bfloat16
    assert jnp.allclose(out6.astype(jnp.float32),
                        prelu_ref(x6, a6).astype(jnp.float32), atol=2e-2, rtol=2e-2)

    print("KERNEL_OK")
</pallas_src>

<mosaic_0001>
module attributes {stable_mosaic.version = 11 : i64} {
  func.func @_prelu_kernel(%arg0: i32, %arg1: i32, %arg2: memref<1x128xf32, #tpu.memory_space<vmem>>, %arg3: memref<4x128xf32, #tpu.memory_space<vmem>>, %arg4: memref<4x128xf32, #tpu.memory_space<vmem>>) attributes {dimension_semantics = [#tpu.dimension_semantics<parallel>, #tpu.dimension_semantics<parallel>], iteration_bounds = array<i64: 1, 1>, scalar_prefetch = 0 : i64, scratch_operands = 0 : i64, tpu.core_type = #tpu.core_type<tc>, window_params = [{transform_indices = @transform_0, window_bounds = array<i64: 1, 128>}, {transform_indices = @transform_1, window_bounds = array<i64: 4, 128>}, {transform_indices = @transform_2, window_bounds = array<i64: 4, 128>}]} {
    %c0 = arith.constant 0 : index
    %c0_0 = arith.constant 0 : index
    %0 = vector.load %arg3[%c0, %c0_0] : memref<4x128xf32, #tpu.memory_space<vmem>>, vector<4x128xf32>
    %c0_1 = arith.constant 0 : index
    %c0_2 = arith.constant 0 : index
    %1 = vector.load %arg2[%c0_1, %c0_2] : memref<1x128xf32, #tpu.memory_space<vmem>>, vector<1x128xf32>
    %2 = vector.broadcast %1 : vector<1x128xf32> to vector<4x128xf32>
    %3 = arith.mulf %0, %2 : vector<4x128xf32>
    %cst = arith.constant 0.000000e+00 : f32
    %4 = vector.broadcast %cst : f32 to vector<4x128xf32>
    %5 = arith.cmpf ogt, %0, %4 : vector<4x128xf32>
    %6 = arith.select %5, %0, %3 : vector<4x128xi1>, vector<4x128xf32>
    %c0_3 = arith.constant 0 : index
    %c0_4 = arith.constant 0 : index
    %7 = vector.load %arg4[%c0_3, %c0_4] : memref<4x128xf32, #tpu.memory_space<vmem>>, vector<4x128xf32>
    tpu.vector_store %arg4[%c0_3, %c0_4], %6 {strides = array<i32>} : memref<4x128xf32, #tpu.memory_space<vmem>>, vector<4x128xf32>,
    return
  }
  func.func @transform_0(%arg0: i32, %arg1: i32) -> (i32, i32) {
    %c0_i32 = arith.constant 0 : i32
    %c0_i32_0 = arith.constant 0 : i32
    return %c0_i32, %arg1 : i32, i32
  }
  func.func @transform_1(%arg0: i32, %arg1: i32) -> (i32, i32) {
    %c0_i32 = arith.constant 0 : i32
    return %arg0, %arg1 : i32, i32
  }
  func.func @transform_2(%arg0: i32, %arg1: i32) -> (i32, i32) {
    %c0_i32 = arith.constant 0 : i32
    return %arg0, %arg1 : i32, i32
  }
}

</mosaic_0001>

<llo_original>
// kernel: tpu_custom_call.1
$region0: #{tpu_custom_call.1}
  #allocation0 [shape = 'u32[]', space=smem, size = 0x4, offset = 0x4, fixed_abs, tag = 'smem constant byte address 0x4 - core index']
  #allocation1 [shape = 'u32[144,128]{1,0:T(1,128)}', space=vmem, size = 0x12000, scoped, tag = 'internal scratch']
  %s0 = inlined_call_operand.hbm [shape: f32[1,128], index: 0, kind: input, shape index: {}]
  %s1 = inlined_call_operand.hbm [shape: f32[4,128], index: 1, kind: input, shape index: {}]
  %s2 = inlined_call_operand.hbm [shape: f32[4,128], index: 2, kind: output, shape index: {}]
  %s3 = sld [smem:[#allocation0]]
  $region26: #{tpu_custom_call.1} parent=0
    _
  %s5 = ssub.s32 1, %s3
  %s6 = scalar_select 0, %s5, %s3
  $region1: #{tpu_custom_call.1} parent=0
    #allocation2 [shape = 'u8[512]{0}', space=vmem, size = 0x400, scoped, tag = 'input window, operand 0, single buffered']
    #allocation3 [shape = 's32[1]{0}', space=sflag, size = 0x4, scoped, tag = 'scoped memory for tpu_custom_call.1']
    #allocation4 [shape = 's32[1]{0}', space=sflag, size = 0x4, scoped, tag = 'scoped memory for tpu_custom_call.1']
    #allocation5 [shape = 'u8[2048]{0}', space=vmem, size = 0x800, scoped, tag = 'input window, operand 1, single buffered']
    #allocation6 [shape = 's32[1]{0}', space=sflag, size = 0x4, scoped, tag = 'scoped memory for tpu_custom_call.1']
    #allocation7 [shape = 'u8[2048]{0}', space=vmem, size = 0x800, scoped, tag = 'output window, operand 0, single buffered']
    %7 = vsyncpa [#allocation3], 0
    %8 = vsyncpa [#allocation6], 0
    %9 = vsyncpa [#allocation4], 0
    // Predicated region
    $region2: #{tpu_custom_call.1} parent=1 // pred_check
      _
    $region3: #{tpu_custom_call.1} parent=1 // pred_check_branch
      %11 = sbr.rel (0) target = $region5
    $region4: #{tpu_custom_call.1} parent=1 // pred_region
      %s13 = ssub.s32 16, 16
      %14 = vsyncadd [#allocation3], %s13
      %s16 = sshll.u32 [#allocation2], 4
      %s17 = int_to_ptr.vmem [resolvable:$true] %s16
      %19 = dma.hbm_to_vmem [thread:$0]  %s0, 16, %s17, [#allocation3]
    $region5: #{tpu_custom_call.1} parent=1 // pred_fallthru
      _
    // Predicated region
    $region6: #{tpu_custom_call.1} parent=1 // pred_check
      _
    $region7: #{tpu_custom_call.1} parent=1 // pred_check_branch
      %21 = sbr.rel (0) target = $region9
    $region8: #{tpu_custom_call.1} parent=1 // pred_region
      %s23 = ssub.s32 64, 64
      %24 = vsyncadd [#allocation6], %s23
      %s26 = sshll.u32 [#allocation5], 4
      %s27 = int_to_ptr.vmem [resolvable:$true] %s26
      %29 = dma.hbm_to_vmem [thread:$0]  %s1, 64, %s27, [#allocation6]
    $region9: #{tpu_custom_call.1} parent=1 // pred_fallthru
      _
    // Predicated region
    $region10: #{tpu_custom_call.1} parent=1 // pred_check
      _
    $region11: #{tpu_custom_call.1} parent=1 // pred_check_branch
      %31 = sbr.rel (0) target = $region13
    $region12: #{tpu_custom_call.1} parent=1 // pred_region
      %32 = dma.done [#allocation3], 16
    $region13: #{tpu_custom_call.1} parent=1 // pred_fallthru
      _
    // Predicated region
    $region14: #{tpu_custom_call.1} parent=1 // pred_check
      _
    $region15: #{tpu_custom_call.1} parent=1 // pred_check_branch
      %34 = sbr.rel (0) target = $region17
    $region16: #{tpu_custom_call.1} parent=1 // pred_region
      %35 = dma.done [#allocation6], 64
    $region17: #{tpu_custom_call.1} parent=1 // pred_fallthru
      _
    %v36 = vld [vmem:[#allocation5] sm:$0xf]
    %v37 = vld [vmem:[#allocation2] sm:$0x1]
    %v39 = vlaneseq
    %v40 = vshrl.u32 %v39, 7
    %v41 = vsub.s32 0, %v40
    %v42 = vrot.slane %v37, %v41
    %v44 = vmul.f32 %v36, %v42
    %vm45 = vcmp.gt.f32.partialorder %v36, 0.0
    %v46 = vsel %vm45, %v36, %v44
    %47 = vst [vmem:[#allocation7] sm:$0xf] %v46
    // Predicated region
    $region18: #{tpu_custom_call.1} parent=1 // pred_check
      _
    $region19: #{tpu_custom_call.1} parent=1 // pred_check_branch
      %49 = sbr.rel (0) target = $region21
    $region20: #{tpu_custom_call.1} parent=1 // pred_region
      %s51 = ssub.s32 64, 64
      %52 = vsyncadd [#allocation4], %s51
      %s54 = sshll.u32 [#allocation7], 4
      %s55 = int_to_ptr.vmem [resolvable:$true] %s54
      %57 = dma.vmem_to_hbm [thread:$0]  %s55, 64, %s2, [#allocation4]
    $region21: #{tpu_custom_call.1} parent=1 // pred_fallthru
      _
    // Predicated region
    $region22: #{tpu_custom_call.1} parent=1 // pred_check
      _
    $region23: #{tpu_custom_call.1} parent=1 // pred_check_branch
      %59 = sbr.rel (0) target = $region25
    $region24: #{tpu_custom_call.1} parent=1 // pred_region
      %60 = dma.done [#allocation4], 64
    $region25: #{tpu_custom_call.1} parent=1 // pred_fallthru
      _
    %61 = vsyncpa [#allocation3], 1
    %62 = vsyncpa [#allocation6], 1
    %63 = vsyncpa [#allocation4], 1

</llo_original>
